<compile_context>
chip_gen: v7x
topology: tpu7x:2x2x1
jax: 0.10.0
libtpu: 0.0.40
codegen_flags: <defaults>
</compile_context>

<pallas_src>
import functools

import jax
import jax.numpy as jnp
from jax import lax
from jax.experimental import pallas as pl
from jax.experimental.pallas import tpu as pltpu

LANE = 128
SUBLANE = 8


def _round_up(x, m):
    return (x + m - 1) // m * m


def _den_terms(pv, tv, power):
    if power == 1:
        return pv + tv
    if power == 2:
        return pv * pv + tv * tv
    return pv ** power + tv ** power


def _vmem_capacity_bytes():
    """Best-effort physical VMEM query; conservative (v7x-sized) fallback."""
    try:
        info = pltpu.get_tpu_info()
        for attr in ("vmem_capacity_bytes", "vmem_bytes", "vmem_size_bytes"):
            v = getattr(info, attr, None)
            if v:
                return int(v)
    except Exception:
        pass
    return 64 << 20


def _choose_blocks(extent, target, granule):
    """Split `extent` into blocks of a multiple-of-`granule` size.

    Returns (block, num_blocks, num_shards, blocks_per_shard) and guarantees
    num_shards * blocks_per_shard == num_blocks: the 'parallel' shard axis is
    only used when the split is even, so there are never phantom / clamped
    duplicate blocks (no redundant DMA on single-TC chips; both v7x TCs get
    exactly half the real work).
    """
    if extent <= target:
        return extent, 1, 1, 1              # one full-extent block, no mask
    block = max(granule, target // granule * granule)
    num_blocks = pl.cdiv(extent, block)
    if num_blocks % 2 != 0:
        # Nudge to an even block count (never exceeds the VMEM-derived block).
        alt = max(granule, _round_up(pl.cdiv(extent, num_blocks + 1), granule))
        if pl.cdiv(extent, alt) % 2 == 0:
            block, num_blocks = alt, pl.cdiv(extent, alt)
    if num_blocks % 2 == 0:
        return block, num_blocks, 2, num_blocks // 2
    return block, num_blocks, 1, num_blocks


# ----------------------------------------------------------------------------
# Kernels
# ----------------------------------------------------------------------------
def _dice_kernel_3d(p_ref, t_ref, num_ref, den_ref, *, power, rows_total,
                    rows_chunk, blocks_per_shard, acc_rows, need_mask):
    """Lane-major path: blocks (N, rows_chunk, 128), accs (N, acc_rows, 128)."""
    shard = pl.program_id(0)
    step = pl.program_id(1)

    @pl.when(step == 0)
    def _init():
        num_ref[...] = jnp.zeros_like(num_ref)
        den_ref[...] = jnp.zeros_like(den_ref)

    p = p_ref[...].astype(jnp.float32)
    t = t_ref[...].astype(jnp.float32)
    n = p.shape[0]

    def _accum(pv, tv):
        prod = pv * tv
        den_blk = _den_terms(pv, tv, power)
        if acc_rows == SUBLANE and rows_chunk == SUBLANE:
            num_ref[...] += prod
            den_ref[...] += den_blk
        elif acc_rows == SUBLANE:
            # Reduce only across whole vregs (VALU adds); 8->1 sublane and
            # lane reductions happen once in the JAX epilogue.
            g = rows_chunk // SUBLANE
            num_ref[...] += prod.reshape(n, g, SUBLANE, LANE).sum(axis=1)
            den_ref[...] += den_blk.reshape(n, g, SUBLANE, LANE).sum(axis=1)
        else:
            num_ref[...] += prod.sum(axis=1, keepdims=True)
            den_ref[...] += den_blk.sum(axis=1, keepdims=True)

    if need_mask:
        # Only the globally-last block is partial; every other step takes the
        # mask-free fast path (the iota/where work is gated behind pl.when).
        rows_left = rows_total - (shard * blocks_per_shard + step) * rows_chunk
        is_full = rows_left >= rows_chunk

        @pl.when(is_full)
        def _fast():
            _accum(p, t)

        @pl.when(jnp.logical_not(is_full))
        def _tail():
            row = lax.broadcasted_iota(jnp.int32, (1, rows_chunk, LANE), 1)
            keep = row < rows_left            # block-relative: no overflow
            _accum(jnp.where(keep, p, 0.0), jnp.where(keep, t, 0.0))
    else:
        _accum(p, t)


def _dice_kernel_2d(p_ref, t_ref, num_ref, den_ref, *, power, d_total, chunk,
                    blocks_per_shard, need_mask):
    """Ragged-D path: blocks (N, chunk) read in place, accs (N, 1)."""
    shard = pl.program_id(0)
    step = pl.program_id(1)

    @pl.when(step == 0)
    def _init():
        num_ref[...] = jnp.zeros_like(num_ref)
        den_ref[...] = jnp.zeros_like(den_ref)

    p = p_ref[...].astype(jnp.float32)
    t = t_ref[...].astype(jnp.float32)

    def _accum(pv, tv):
        num_ref[...] += jnp.sum(pv * tv, axis=1, keepdims=True)
        den_ref[...] += jnp.sum(_den_terms(pv, tv, power), axis=1,
                                keepdims=True)

    if need_mask:
        lanes_left = d_total - (shard * blocks_per_shard + step) * chunk
        is_full = lanes_left >= chunk

        @pl.when(is_full)
        def _fast():
            _accum(p, t)

        @pl.when(jnp.logical_not(is_full))
        def _tail():
            lane = lax.broadcasted_iota(jnp.int32, (1, chunk), 1)
            keep = lane < lanes_left
            _accum(jnp.where(keep, p, 0.0), jnp.where(keep, t, 0.0))
    else:
        _accum(p, t)


# ----------------------------------------------------------------------------
# Wrappers
# ----------------------------------------------------------------------------
def _dice_sums_3d(pred2d, targ2d, *, power, target_block_bytes, vmem_cap):
    n, d = pred2d.shape
    r = d // LANE
    itemsize = max(jnp.dtype(pred2d.dtype).itemsize,
                   jnp.dtype(targ2d.dtype).itemsize)
    sub_mult = max(SUBLANE, 32 // itemsize)      # dtype-aware sublane packing

    def _vmem_need(rows):
        elems = n * rows * LANE
        extra = (2 if itemsize < 4 else 1) * elems * 4   # f32 upcast headroom
        return 4 * elems * itemsize + extra + (4 << 20)

    vmem_budget = max(32 << 20, vmem_cap * 3 // 4)
    rows_target = max(sub_mult, target_block_bytes // (n * LANE * itemsize)
                      // sub_mult * sub_mult)
    while rows_target > sub_mult and _vmem_need(rows_target) > vmem_budget:
        rows_target = max(sub_mult, rows_target // 2 // sub_mult * sub_mult)

    rows_chunk, num_blocks, num_shards, bps = _choose_blocks(
        r, rows_target, sub_mult)
    need_mask = (num_blocks * rows_chunk) != r
    acc_rows = SUBLANE if rows_chunk % SUBLANE == 0 else 1

    pred3d = pred2d.reshape(n, r, LANE)   # free: contiguous, lane-major view
    targ3d = targ2d.reshape(n, r, LANE)

    kernel = functools.partial(
        _dice_kernel_3d, power=power, rows_total=r, rows_chunk=rows_chunk,
        blocks_per_shard=bps, acc_rows=acc_rows, need_mask=need_mask)

    in_map = lambda s, k: (0, s * bps + k, 0)
    out_map = lambda s, k: (s, 0, 0, 0)
    acc_shape = jax.ShapeDtypeStruct((num_shards, n, acc_rows, LANE),
                                     jnp.float32)
    cost = pl.CostEstimate(
        flops=int(6 * n * d), transcendentals=0,
        bytes_accessed=int(2 * n * d * itemsize
                           + 2 * num_shards * n * acc_rows * LANE * 4))

    num_part, den_part = pl.pallas_call(
        kernel,
        out_shape=(acc_shape, acc_shape),
        grid_spec=pltpu.PrefetchScalarGridSpec(
            num_scalar_prefetch=0,
            grid=(num_shards, bps),
            in_specs=[pl.BlockSpec((n, rows_chunk, LANE), in_map),
                      pl.BlockSpec((n, rows_chunk, LANE), in_map)],
            out_specs=[pl.BlockSpec((None, n, acc_rows, LANE), out_map),
                       pl.BlockSpec((None, n, acc_rows, LANE), out_map)]),
        compiler_params=pltpu.CompilerParams(
            dimension_semantics=("parallel", "arbitrary"),
            vmem_limit_bytes=int(min(vmem_budget,
                                     max(32 << 20, _vmem_need(rows_chunk))))),
        cost_estimate=cost,
    )(pred3d, targ3d)

    return num_part.sum(axis=(0, 2, 3)), den_part.sum(axis=(0, 2, 3))


def _dice_sums_2d(pred2d, targ2d, *, power, target_block_bytes, vmem_cap):
    """Ragged-D (D % 128 != 0) path: no jnp.pad / no extra HBM copies."""
    n, d = pred2d.shape
    itemsize = max(jnp.dtype(pred2d.dtype).itemsize,
                   jnp.dtype(targ2d.dtype).itemsize)
    n_vmem = _round_up(n, SUBLANE)       # sublane-padded VMEM block footprint

    def _vmem_need(chunk):
        elems = n_vmem * chunk
        extra = (2 if itemsize < 4 else 1) * elems * 4
        return 4 * elems * itemsize + extra + (4 << 20)

    vmem_budget = max(32 << 20, vmem_cap * 3 // 4)
    chunk_target = max(LANE, target_block_bytes // (n_vmem * itemsize)
                       // LANE * LANE)
    while chunk_target > LANE and _vmem_need(chunk_target) > vmem_budget:
        chunk_target = max(LANE, chunk_target // 2 // LANE * LANE)

    chunk, num_blocks, num_shards, bps = _choose_blocks(d, chunk_target, LANE)
    need_mask = (num_blocks * chunk) != d

    kernel = functools.partial(
        _dice_kernel_2d, power=power, d_total=d, chunk=chunk,
        blocks_per_shard=bps, need_mask=need_mask)

    in_map = lambda s, k: (0, s * bps + k)
    out_map = lambda s, k: (s, 0, 0)
    acc_shape = jax.ShapeDtypeStruct((num_shards, n, 1), jnp.float32)
    cost = pl.CostEstimate(
        flops=int(6 * n * d), transcendentals=0,
        bytes_accessed=int(2 * n * d * itemsize + 2 * num_shards * n * 4))

    num_part, den_part = pl.pallas_call(
        kernel,
        out_shape=(acc_shape, acc_shape),
        grid_spec=pltpu.PrefetchScalarGridSpec(
            num_scalar_prefetch=0,
            grid=(num_shards, bps),
            in_specs=[pl.BlockSpec((n, chunk), in_map),
                      pl.BlockSpec((n, chunk), in_map)],
            out_specs=[pl.BlockSpec((None, n, 1), out_map),
                       pl.BlockSpec((None, n, 1), out_map)]),
        compiler_params=pltpu.CompilerParams(
            dimension_semantics=("parallel", "arbitrary"),
            vmem_limit_bytes=int(min(vmem_budget,
                                     max(32 << 20, _vmem_need(chunk))))),
        cost_estimate=cost,
    )(pred2d, targ2d)

    return num_part.sum(axis=(0, 2)), den_part.sum(axis=(0, 2))


def binary_dice_loss(predict, target, *, smooth=1.0, p=2, reduction="mean",
                     target_block_bytes=None):
    """Matches BinaryDiceLoss.forward: num=sum(x*y)+s, den=sum(x^p+y^p)+s."""
    assert predict.shape[0] == target.shape[0], \
        "predict & target batch size don't match"
    n = predict.shape[0]
    pred2d = predict.reshape(n, -1)
    targ2d = target.reshape(n, -1)
    assert pred2d.shape == targ2d.shape, "predict & target shapes don't match"
    d = pred2d.shape[1]

    vmem_cap = _vmem_capacity_bytes()
    if target_block_bytes is None:
        # Generation-aware block size: ~16 MiB on 128 MiB-VMEM chips
        # (v5e/v6e), ~8 MiB on v7x's 64 MiB/TC (or if detection fails).
        target_block_bytes = (16 << 20) if vmem_cap >= (96 << 20) else (8 << 20)

    if d % LANE == 0:
        num, den = _dice_sums_3d(pred2d, targ2d, power=p,
                                 target_block_bytes=target_block_bytes,
                                 vmem_cap=vmem_cap)
    else:
        num, den = _dice_sums_2d(pred2d, targ2d, power=p,
                                 target_block_bytes=target_block_bytes,
                                 vmem_cap=vmem_cap)

    num = num + smooth
    den = den + smooth
    loss = 1.0 - num / den          # shape [N]

    if reduction == "mean":
        return jnp.mean(loss)
    elif reduction == "sum":
        return jnp.sum(loss)
    elif reduction == "none":
        return loss
    else:
        raise Exception("Unexpected reduction {}".format(reduction))


def _ref_loss(pred, targ, smooth=1.0, p=2):
    n = pred.shape[0]
    p2 = pred.reshape(n, -1).astype(jnp.float32)
    t2 = targ.reshape(n, -1).astype(jnp.float32)
    num = jnp.sum(p2 * t2, axis=1) + smooth
    den = jnp.sum(p2 ** p + t2 ** p, axis=1) + smooth
    return jnp.mean(1.0 - num / den)


if __name__ == "__main__":
    key = jax.random.PRNGKey(0)
    ks = jax.random.split(key, 8)

    # Case 1: canonical small NCHW shape [2, 4, 16, 16] (3-D fast path,
    # single block, no masking, default generation-aware sizing).
    N, C, H, W = 2, 4, 16, 16
    predict = jax.nn.sigmoid(jax.random.normal(ks[0], (N, C, H, W), jnp.float32))
    target = (jax.random.uniform(ks[1], (N, C, H, W)) > 0.5).astype(jnp.float32)
    loss = jax.block_until_ready(binary_dice_loss(predict, target))
    ref = _ref_loss(predict, target)
    assert jnp.allclose(loss, ref, rtol=1e-5, atol=1e-5), (loss, ref)

    # Case 2: D not a multiple of 128 (ragged 2-D path, single full-dim
    # block, no pad, no mask).
    p2 = jax.nn.sigmoid(jax.random.normal(ks[2], (3, 3, 37, 29), jnp.float32))
    t2 = (jax.random.uniform(ks[3], (3, 3, 37, 29)) > 0.5).astype(jnp.float32)
    loss2 = jax.block_until_ready(binary_dice_loss(p2, t2))
    ref2 = _ref_loss(p2, t2)
    assert jnp.allclose(loss2, ref2, rtol=1e-5, atol=1e-5), (loss2, ref2)

    # Case 3: 3-D path with multiple blocks, even 2-way shard split and the
    # gated tail mask (D = 11*16*32 = 5632 = 44 lanes of 128; rows_chunk=32).
    p3 = jax.nn.sigmoid(jax.random.normal(ks[4], (2, 11, 16, 32), jnp.float32))
    t3 = (jax.random.uniform(ks[5], (2, 11, 16, 32)) > 0.5).astype(jnp.float32)
    loss3 = jax.block_until_ready(
        binary_dice_loss(p3, t3, target_block_bytes=32 * 1024))
    ref3 = _ref_loss(p3, t3)
    assert jnp.allclose(loss3, ref3, rtol=1e-5, atol=1e-5), (loss3, ref3)

    # Case 4: ragged 2-D path with multiple 128-multiple chunks and a masked
    # partial last block (D = 5*37*23 = 4255).
    p4 = jax.nn.sigmoid(jax.random.normal(ks[6], (2, 5, 37, 23), jnp.float32))
    t4 = (jax.random.uniform(ks[7], (2, 5, 37, 23)) > 0.5).astype(jnp.float32)
    loss4 = jax.block_until_ready(
        binary_dice_loss(p4, t4, target_block_bytes=16 * 1024))
    ref4 = _ref_loss(p4, t4)
    assert jnp.allclose(loss4, ref4, rtol=1e-5, atol=1e-5), (loss4, ref4)

    print("KERNEL_OK")
</pallas_src>

<mosaic_0001>
module attributes {stable_mosaic.version = 11 : i64} {
  func.func @_dice_kernel_3d(%arg0: i32, %arg1: i32, %arg2: memref<2x8x128xf32, #tpu.memory_space<vmem>>, %arg3: memref<2x8x128xf32, #tpu.memory_space<vmem>>, %arg4: memref<1x2x8x128xf32, #tpu.memory_space<vmem>>, %arg5: memref<1x2x8x128xf32, #tpu.memory_space<vmem>>) attributes {dimension_semantics = [#tpu.dimension_semantics<parallel>, #tpu.dimension_semantics<arbitrary>], iteration_bounds = array<i64: 1, 1>, scalar_prefetch = 0 : i64, scratch_operands = 0 : i64, tpu.core_type = #tpu.core_type<tc>, window_params = [{transform_indices = @transform_0, window_bounds = array<i64: 2, 8, 128>}, {transform_indices = @transform_1, window_bounds = array<i64: 2, 8, 128>}, {transform_indices = @transform_2, window_bounds = array<i64: 1, 2, 8, 128>}, {transform_indices = @transform_3, window_bounds = array<i64: 1, 2, 8, 128>}]} {
    %c0_i32 = arith.constant 0 : i32
    %0 = arith.cmpi eq, %arg1, %c0_i32 : i32
    %1 = arith.extui %0 : i1 to i32
    %c0_i32_0 = arith.constant 0 : i32
    %2 = arith.cmpi ne, %1, %c0_i32_0 : i32
    scf.if %2 {
      %cst = arith.constant 0.000000e+00 : f32
      %21 = vector.broadcast %cst : f32 to vector<2x8x128xf32>
      %c0_22 = arith.constant 0 : index
      %c0_23 = arith.constant 0 : index
      %c0_24 = arith.constant 0 : index
      %c0_25 = arith.constant 0 : index
      %22 = vector.load %arg4[%c0_22, %c0_23, %c0_24, %c0_25] : memref<1x2x8x128xf32, #tpu.memory_space<vmem>>, vector<1x2x8x128xf32>
      %23 = vector.shape_cast %22 : vector<1x2x8x128xf32> to vector<2x8x128xf32>
      %24 = vector.shape_cast %21 : vector<2x8x128xf32> to vector<1x2x8x128xf32>
      tpu.vector_store %arg4[%c0_22, %c0_23, %c0_24, %c0_25], %24 {strides = array<i32>} : memref<1x2x8x128xf32, #tpu.memory_space<vmem>>, vector<1x2x8x128xf32>,
      %cst_26 = arith.constant 0.000000e+00 : f32
      %25 = vector.broadcast %cst_26 : f32 to vector<2x8x128xf32>
      %c0_27 = arith.constant 0 : index
      %c0_28 = arith.constant 0 : index
      %c0_29 = arith.constant 0 : index
      %c0_30 = arith.constant 0 : index
      %26 = vector.load %arg5[%c0_27, %c0_28, %c0_29, %c0_30] : memref<1x2x8x128xf32, #tpu.memory_space<vmem>>, vector<1x2x8x128xf32>
      %27 = vector.shape_cast %26 : vector<1x2x8x128xf32> to vector<2x8x128xf32>
      %28 = vector.shape_cast %25 : vector<2x8x128xf32> to vector<1x2x8x128xf32>
      tpu.vector_store %arg5[%c0_27, %c0_28, %c0_29, %c0_30], %28 {strides = array<i32>} : memref<1x2x8x128xf32, #tpu.memory_space<vmem>>, vector<1x2x8x128xf32>,
    } else {
    }
    %c0 = arith.constant 0 : index
    %c0_1 = arith.constant 0 : index
    %c0_2 = arith.constant 0 : index
    %3 = vector.load %arg2[%c0, %c0_1, %c0_2] : memref<2x8x128xf32, #tpu.memory_space<vmem>>, vector<2x8x128xf32>
    %c0_3 = arith.constant 0 : index
    %c0_4 = arith.constant 0 : index
    %c0_5 = arith.constant 0 : index
    %4 = vector.load %arg3[%c0_3, %c0_4, %c0_5] : memref<2x8x128xf32, #tpu.memory_space<vmem>>, vector<2x8x128xf32>
    %5 = arith.mulf %3, %4 : vector<2x8x128xf32>
    %6 = arith.mulf %3, %3 : vector<2x8x128xf32>
    %7 = arith.mulf %4, %4 : vector<2x8x128xf32>
    %8 = arith.addf %6, %7 : vector<2x8x128xf32>
    %c0_6 = arith.constant 0 : index
    %c0_7 = arith.constant 0 : index
    %c0_8 = arith.constant 0 : index
    %c0_9 = arith.constant 0 : index
    %9 = vector.load %arg4[%c0_6, %c0_7, %c0_8, %c0_9] : memref<1x2x8x128xf32, #tpu.memory_space<vmem>>, vector<1x2x8x128xf32>
    %10 = vector.shape_cast %9 : vector<1x2x8x128xf32> to vector<2x8x128xf32>
    %11 = arith.addf %10, %5 : vector<2x8x128xf32>
    %c0_10 = arith.constant 0 : index
    %c0_11 = arith.constant 0 : index
    %c0_12 = arith.constant 0 : index
    %c0_13 = arith.constant 0 : index
    %12 = vector.load %arg4[%c0_10, %c0_11, %c0_12, %c0_13] : memref<1x2x8x128xf32, #tpu.memory_space<vmem>>, vector<1x2x8x128xf32>
    %13 = vector.shape_cast %12 : vector<1x2x8x128xf32> to vector<2x8x128xf32>
    %14 = vector.shape_cast %11 : vector<2x8x128xf32> to vector<1x2x8x128xf32>
    tpu.vector_store %arg4[%c0_10, %c0_11, %c0_12, %c0_13], %14 {strides = array<i32>} : memref<1x2x8x128xf32, #tpu.memory_space<vmem>>, vector<1x2x8x128xf32>,
    %c0_14 = arith.constant 0 : index
    %c0_15 = arith.constant 0 : index
    %c0_16 = arith.constant 0 : index
    %c0_17 = arith.constant 0 : index
    %15 = vector.load %arg5[%c0_14, %c0_15, %c0_16, %c0_17] : memref<1x2x8x128xf32, #tpu.memory_space<vmem>>, vector<1x2x8x128xf32>
    %16 = vector.shape_cast %15 : vector<1x2x8x128xf32> to vector<2x8x128xf32>
    %17 = arith.addf %16, %8 : vector<2x8x128xf32>
    %c0_18 = arith.constant 0 : index
    %c0_19 = arith.constant 0 : index
    %c0_20 = arith.constant 0 : index
    %c0_21 = arith.constant 0 : index
    %18 = vector.load %arg5[%c0_18, %c0_19, %c0_20, %c0_21] : memref<1x2x8x128xf32, #tpu.memory_space<vmem>>, vector<1x2x8x128xf32>
    %19 = vector.shape_cast %18 : vector<1x2x8x128xf32> to vector<2x8x128xf32>
    %20 = vector.shape_cast %17 : vector<2x8x128xf32> to vector<1x2x8x128xf32>
    tpu.vector_store %arg5[%c0_18, %c0_19, %c0_20, %c0_21], %20 {strides = array<i32>} : memref<1x2x8x128xf32, #tpu.memory_space<vmem>>, vector<1x2x8x128xf32>,
    return
  }
  func.func @transform_0(%arg0: i32, %arg1: i32) -> (i32, i32, i32) {
    %c1_i32 = arith.constant 1 : i32
    %0 = arith.muli %arg0, %c1_i32 : i32
    %1 = arith.addi %0, %arg1 : i32
    %c0_i32 = arith.constant 0 : i32
    %c0_i32_0 = arith.constant 0 : i32
    %c0_i32_1 = arith.constant 0 : i32
    return %c0_i32, %1, %c0_i32_0 : i32, i32, i32
  }
  func.func @transform_1(%arg0: i32, %arg1: i32) -> (i32, i32, i32) {
    %c1_i32 = arith.constant 1 : i32
    %0 = arith.muli %arg0, %c1_i32 : i32
    %1 = arith.addi %0, %arg1 : i32
    %c0_i32 = arith.constant 0 : i32
    %c0_i32_0 = arith.constant 0 : i32
    %c0_i32_1 = arith.constant 0 : i32
    return %c0_i32, %1, %c0_i32_0 : i32, i32, i32
  }
  func.func @transform_2(%arg0: i32, %arg1: i32) -> (i32, i32, i32, i32) {
    %c0_i32 = arith.constant 0 : i32
    %c0_i32_0 = arith.constant 0 : i32
    %c0_i32_1 = arith.constant 0 : i32
    %c0_i32_2 = arith.constant 0 : i32
    return %arg0, %c0_i32, %c0_i32_0, %c0_i32_1 : i32, i32, i32, i32
  }
  func.func @transform_3(%arg0: i32, %arg1: i32) -> (i32, i32, i32, i32) {
    %c0_i32 = arith.constant 0 : i32
    %c0_i32_0 = arith.constant 0 : i32
    %c0_i32_1 = arith.constant 0 : i32
    %c0_i32_2 = arith.constant 0 : i32
    return %arg0, %c0_i32, %c0_i32_0, %c0_i32_1 : i32, i32, i32, i32
  }
}

</mosaic_0001>

<llo_original>
// kernel: tpu_custom_call.1
$region0: #{tpu_custom_call.1}
  #allocation0 [shape = 'u32[]', space=smem, size = 0x4, offset = 0x4, fixed_abs, tag = 'smem constant byte address 0x4 - core index']
  #allocation1 [shape = 'u32[144,128]{1,0:T(1,128)}', space=vmem, size = 0x12000, scoped, tag = 'internal scratch']
  %s0 = inlined_call_operand.hbm [shape: f32[2,8,128], index: 0, kind: input, shape index: {}]
  %s1 = inlined_call_operand.hbm [shape: f32[2,8,128], index: 1, kind: input, shape index: {}]
  %s2 = inlined_call_operand.hbm [shape: f32[1,2,8,128], index: 2, kind: output, shape index: {0}]
  %s3 = inlined_call_operand.hbm [shape: f32[1,2,8,128], index: 3, kind: output, shape index: {1}]
  %4 = xla_tuple %s2, %s3
  %s5 = sld [smem:[#allocation0]]
  $region38: #{tpu_custom_call.1} parent=0
    _
  %s7 = ssub.s32 1, %s5
  %s8 = scalar_select 0, %s7, %s5
  $region1: #{tpu_custom_call.1} parent=0
    #allocation2 [shape = 'u8[8192]{0}', space=vmem, size = 0x2000, scoped, tag = 'input window, operand 0, single buffered']
    #allocation3 [shape = 's32[1]{0}', space=sflag, size = 0x4, scoped, tag = 'scoped memory for tpu_custom_call.1']
    #allocation4 [shape = 's32[1]{0}', space=sflag, size = 0x4, scoped, tag = 'scoped memory for tpu_custom_call.1']
    #allocation5 [shape = 'u8[8192]{0}', space=vmem, size = 0x2000, scoped, tag = 'input window, operand 1, single buffered']
    #allocation6 [shape = 's32[1]{0}', space=sflag, size = 0x4, scoped, tag = 'scoped memory for tpu_custom_call.1']
    #allocation7 [shape = 'u8[8192]{0}', space=vmem, size = 0x2000, scoped, tag = 'output window, operand 0, single buffered']
    #allocation8 [shape = 'u8[8192]{0}', space=vmem, size = 0x2000, scoped, tag = 'output window, operand 1, single buffered']
    #allocation9 [shape = 's32[1]{0}', space=sflag, size = 0x4, scoped, tag = 'scoped memory for tpu_custom_call.1']
    %9 = vsyncpa [#allocation3], 0
    %10 = vsyncpa [#allocation6], 0
    %11 = vsyncpa [#allocation4], 0
    %12 = vsyncpa [#allocation9], 0
    // Predicated region
    $region2: #{tpu_custom_call.1} parent=1 // pred_check
      _
    $region3: #{tpu_custom_call.1} parent=1 // pred_check_branch
      %14 = sbr.rel (0) target = $region5
    $region4: #{tpu_custom_call.1} parent=1 // pred_region
      %s15 = sadd.s32 0, 0
      %s17 = ssub.s32 256, 256
      %18 = vsyncadd [#allocation3], %s17
      %s19 = smul.addr %s15, 128
      %s20 = scalar_lea.hbm %s0, %s19
      %s21 = sshll.u32 [#allocation2], 4
      %s22 = int_to_ptr.vmem [resolvable:$true] %s21
      %27 = dma.hbm_to_vmem [thread:$0]  %s20, 256, %s22, [#allocation3], 128, 128, 8
    $region5: #{tpu_custom_call.1} parent=1 // pred_fallthru
      _
    // Predicated region
    $region6: #{tpu_custom_call.1} parent=1 // pred_check
      _
    $region7: #{tpu_custom_call.1} parent=1 // pred_check_branch
      %29 = sbr.rel (0) target = $region9
    $region8: #{tpu_custom_call.1} parent=1 // pred_region
      %s30 = sadd.s32 0, 0
      %s32 = ssub.s32 256, 256
      %33 = vsyncadd [#allocation6], %s32
      %s34 = smul.addr %s30, 128
      %s35 = scalar_lea.hbm %s1, %s34
      %s36 = sshll.u32 [#allocation5], 4
      %s37 = int_to_ptr.vmem [resolvable:$true] %s36
      %42 = dma.hbm_to_vmem [thread:$0]  %s35, 256, %s37, [#allocation6], 128, 128, 8
    $region9: #{tpu_custom_call.1} parent=1 // pred_fallthru
      _
    // Predicated region
    $region10: #{tpu_custom_call.1} parent=1 // pred_check
      _
    $region11: #{tpu_custom_call.1} parent=1 // pred_check_branch
      %44 = sbr.rel (0) target = $region13
    $region12: #{tpu_custom_call.1} parent=1 // pred_region
      %45 = dma.done [#allocation3], 256
    $region13: #{tpu_custom_call.1} parent=1 // pred_fallthru
      _
    // Predicated region
    $region14: #{tpu_custom_call.1} parent=1 // pred_check
      _
    $region15: #{tpu_custom_call.1} parent=1 // pred_check_branch
      %47 = sbr.rel (0) target = $region17
    $region16: #{tpu_custom_call.1} parent=1 // pred_region
      %48 = dma.done [#allocation6], 256
    $region17: #{tpu_custom_call.1} parent=1 // pred_fallthru
      _
    %s49 = sadd.s32 0, 0
    %s50 = sadd.s32 0, 0
    %p51 = scmp.eq.s32.totalorder 0, 0
    // Predicated region
    $region18: #{tpu_custom_call.1} parent=1 // pred_check
      %p52 = pneg %p51
    $region19: #{tpu_custom_call.1} parent=1 // pred_check_branch
      %54 = sbr.rel (%p52) target = $region21
    $region20: #{tpu_custom_call.1} parent=1 // pred_region
      %55 = vst [vmem:[#allocation7] sm:$0xff] 0.0
      %56 = vst [vmem:[#allocation7 + $0x8] sm:$0xff] 0.0
      %57 = vst [vmem:[#allocation8] sm:$0xff] 0.0
      %58 = vst [vmem:[#allocation8 + $0x8] sm:$0xff] 0.0
    $region21: #{tpu_custom_call.1} parent=1 // pred_fallthru
      _
    %v59 = vld [vmem:[#allocation2] sm:$0xff]
    %v60 = vld [vmem:[#allocation2 + $0x8] sm:$0xff]
    %v61 = vld [vmem:[#allocation5] sm:$0xff]
    %v62 = vld [vmem:[#allocation5 + $0x8] sm:$0xff]
    %v63 = vmul.f32 %v59, %v61
    %v64 = vmul.f32 %v60, %v62
    %v65 = vmul.f32 %v59, %v59
    %v66 = vmul.f32 %v60, %v60
    %v67 = vmul.f32 %v61, %v61
    %v68 = vmul.f32 %v62, %v62
    %v69 = vadd.f32 %v65, %v67
    %v70 = vadd.f32 %v66, %v68
    %v71 = vld [vmem:[#allocation7] sm:$0xff]
    %v72 = vld [vmem:[#allocation7 + $0x8] sm:$0xff]
    %v73 = vadd.f32 %v71, %v63
    %v74 = vadd.f32 %v72, %v64
    %75 = vst [vmem:[#allocation7] sm:$0xff] %v73
    %76 = vst [vmem:[#allocation7 + $0x8] sm:$0xff] %v74
    %v77 = vld [vmem:[#allocation8] sm:$0xff]
    %v78 = vld [vmem:[#allocation8 + $0x8] sm:$0xff]
    %v79 = vadd.f32 %v77, %v69
    %v80 = vadd.f32 %v78, %v70
    %81 = vst [vmem:[#allocation8] sm:$0xff] %v79
    %82 = vst [vmem:[#allocation8 + $0x8] sm:$0xff] %v80
    // Predicated region
    $region22: #{tpu_custom_call.1} parent=1 // pred_check
      _
    $region23: #{tpu_custom_call.1} parent=1 // pred_check_branch
      %84 = sbr.rel (0) target = $region25
    $region24: #{tpu_custom_call.1} parent=1 // pred_region
      %s86 = ssub.s32 256, 256
      %87 = vsyncadd [#allocation4], %s86
      %s88 = sshll.u32 [#allocation7], 4
      %s89 = int_to_ptr.vmem [resolvable:$true] %s88
      %94 = dma.vmem_to_hbm [thread:$0]  %s89, 256, %s2, [#allocation4], 128, 128, 8
    $region25: #{tpu_custom_call.1} parent=1 // pred_fallthru
      _
    // Predicated region
    $region26: #{tpu_custom_call.1} parent=1 // pred_check
      _
    $region27: #{tpu_custom_call.1} parent=1 // pred_check_branch
      %96 = sbr.rel (0) target = $region29
    $region28: #{tpu_custom_call.1} parent=1 // pred_region
      %s98 = ssub.s32 256, 256
      %99 = vsyncadd [#allocation9], %s98
      %s100 = sshll.u32 [#allocation8], 4
      %s101 = int_to_ptr.vmem [resolvable:$true] %s100
      %106 = dma.vmem_to_hbm [thread:$0]  %s101, 256, %s3, [#allocation9], 128, 128, 8
    $region29: #{tpu_custom_call.1} parent=1 // pred_fallthru
      _
    // Predicated region
    $region30: #{tpu_custom_call.1} parent=1 // pred_check
      _
    $region31: #{tpu_custom_call.1} parent=1 // pred_check_branch
      %108 = sbr.rel (0) target = $region33
    $region32: #{tpu_custom_call.1} parent=1 // pred_region
      %109 = dma.done [#allocation4], 256
    $region33: #{tpu_custom_call.1} parent=1 // pred_fallthru
      _
    // Predicated region
    $region34: #{tpu_custom_call.1} parent=1 // pred_check
      _
    $region35: #{tpu_custom_call.1} parent=1 // pred_check_branch
      %111 = sbr.rel (0) target = $region37
    $region36: #{tpu_custom_call.1} parent=1 // pred_region
      %112 = dma.done [#allocation9], 256
    $region37: #{tpu_custom_call.1} parent=1 // pred_fallthru
      _
    %113 = vsyncpa [#allocation3], 1
    %114 = vsyncpa [#allocation6], 1
    %115 = vsyncpa [#allocation4], 1
    %116 = vsyncpa [#allocation9], 1

</llo_original>
